<compile_context>
chip_gen: v7x
topology: tpu7x:2x2x1
jax: 0.10.0
libtpu: 0.0.40
codegen_flags: <defaults>
</compile_context>

<pallas_src>
import functools
import math

import jax
import jax.numpy as jnp
from jax.experimental import pallas as pl
from jax.experimental.pallas import tpu as pltpu


# ---------------------------------------------------------------------------
# Pallas kernel 1: tiled linear forward  y = x @ W + b
#   bf16 inputs (native MXU dtype on v5e/v6e/v7x), f32 accumulation,
#   f32 bias epilogue (required on v5e: no bf16 VALU/EUP).
# ---------------------------------------------------------------------------
def _linear_kernel(x_ref, w_ref, b_ref, o_ref, acc_ref):
    k = pl.program_id(2)

    @pl.when(k == 0)
    def _():
        acc_ref[...] = jnp.zeros_like(acc_ref)

    acc_ref[...] += jnp.dot(
        x_ref[...], w_ref[...], preferred_element_type=jnp.float32
    )

    @pl.when(k == pl.num_programs(2) - 1)
    def _():
        o_ref[...] = (acc_ref[...] + b_ref[...]).astype(o_ref.dtype)


@functools.partial(jax.jit, static_argnames=("tm", "tn", "tk"))
def pallas_linear(x, w, b2d, *, tm=256, tn=256, tk=512):
    """x: (B, Fin), w: (Fin, Fout), b2d: (1, Fout). Returns f32 (B, Fout)."""
    B, Fin = x.shape
    Fout = w.shape[1]
    tm = min(tm, B)      # larger tm/tk halve K-axis grid steps at real sizes
    tn = min(tn, Fout)   # 256-wide tiles feed v6e/v7x's 256-wide MXU
    tk = min(tk, Fin)
    assert B % tm == 0 and Fout % tn == 0 and Fin % tk == 0, \
        "demo shapes must be tile-aligned (Fout/Fin multiples of 128, B of 8)"
    # Cast matmul operands to bf16 OUTSIDE the kernel: halves the HBM/DMA
    # bytes and hits the native MXU path on every generation; accumulation
    # and the bias epilogue stay in f32 to preserve LocalSGD numerics.
    x_bf = x.astype(jnp.bfloat16)
    w_bf = w.astype(jnp.bfloat16)
    b_f32 = b2d.astype(jnp.float32)
    grid = (B // tm, Fout // tn, Fin // tk)
    # NOTE(v7x): at real sizes B//tm * Fout//tn >= 2 so both TensorCores get
    # blocks; at the demo shapes the grid is (1,1,1) and this is moot.
    return pl.pallas_call(
        _linear_kernel,
        out_shape=jax.ShapeDtypeStruct((B, Fout), jnp.float32),
        grid=grid,
        in_specs=[
            pl.BlockSpec((tm, tk), lambda i, j, k: (i, k)),
            pl.BlockSpec((tk, tn), lambda i, j, k: (k, j)),
            pl.BlockSpec((1, tn), lambda i, j, k: (0, j)),
        ],
        out_specs=pl.BlockSpec((tm, tn), lambda i, j, k: (i, j)),
        scratch_shapes=[pltpu.VMEM((tm, tn), jnp.float32)],
        compiler_params=pltpu.CompilerParams(
            dimension_semantics=("parallel", "parallel", "arbitrary")
        ),
    )(x_bf, w_bf, b_f32)


# ---------------------------------------------------------------------------
# Pallas kernel 2: fused allreduce-mean over a (simulated) worker axis.
#   Worker axis last ("arbitrary"); the f32 output block is resident across
#   it, so we accumulate directly into o_ref (no scratch accumulator).
# ---------------------------------------------------------------------------
def _avg_accum_kernel(local_ref, peer_ref, o_ref, *, inv_workers):
    w = pl.program_id(1)

    @pl.when(w == 0)
    def _():
        o_ref[...] = local_ref[...]

    o_ref[...] += peer_ref[...]

    @pl.when(w == pl.num_programs(1) - 1)
    def _():
        o_ref[...] = o_ref[...] * inv_workers


def pallas_allreduce_mean(local_slab, peers, *, tr):
    """Mean of (local_slab, peers[0], ..., peers[P-1]).

    local_slab: (R, C) f32, C a multiple of 128, R a multiple of tr (mult. of 8).
    peers:      (P, R, C) f32 simulated remote replicas.
    The averaged result is aliased onto local_slab's buffer.
    """
    R, C = local_slab.shape
    P = peers.shape[0]
    assert R % tr == 0 and tr % 8 == 0 and C % 128 == 0
    grid = (R // tr, P)  # tc == C -> whole-width, fully contiguous tiles
    kernel = functools.partial(_avg_accum_kernel, inv_workers=1.0 / float(P + 1))
    return pl.pallas_call(
        kernel,
        out_shape=jax.ShapeDtypeStruct((R, C), jnp.float32),
        grid=grid,
        in_specs=[
            # local params: same block for every worker step -> fetched once/row-tile
            pl.BlockSpec((tr, C), lambda i, w: (i, 0)),
            # peer replica w: one (tr, C) block per step, double-buffered DMA
            pl.BlockSpec((None, tr, C), lambda i, w: (w, i, 0)),
        ],
        out_specs=pl.BlockSpec((tr, C), lambda i, w: (i, 0)),
        input_output_aliases={0: 0},  # averaged params overwrite the local slab
        compiler_params=pltpu.CompilerParams(
            dimension_semantics=("parallel", "arbitrary"),
            # VMEM/step ~ 6x tile (2x local + 2x peer + 2x out); raise the
            # scoped limit so ~1 MiB tiles compile on v5e (16 MiB default)
            # while staying well under v7x's 64 MiB physical VMEM.
            vmem_limit_bytes=48 * 1024 * 1024,
        ),
    )(local_slab, peers)


# ---------------------------------------------------------------------------
# Slab geometry: lane-dense columns, big row tiles, >= 2 row blocks (v7x).
# ---------------------------------------------------------------------------
_LANES = 512           # lane-dense columns (multiple of 128)
_MAX_TILE_ROWS = 512   # 512 x 512 f32 tile = 1 MiB -> ~HBM-roofline DMAs
_MIN_ROW_BLOCKS = 2    # keep >= 2 blocks on the "parallel" row axis (v7x 2 TCs)


def _pack_geometry(total_elems, lanes=_LANES):
    rows = -(-total_elems // lanes)            # ceil
    rows = ((rows + 7) // 8) * 8               # sublane-aligned
    tr = min(_MAX_TILE_ROWS, max(8, rows // _MIN_ROW_BLOCKS))
    tr = max(8, (tr // 8) * 8)
    R = ((rows + tr - 1) // tr) * tr           # pad rows so R % tr == 0
    return R, tr


@functools.partial(jax.jit, static_argnames=("num_workers", "tr"))
def _simulate_and_average(slab, *, num_workers, tr):
    # TODO(synk): a real torchft allreduce is an ICI collective; on TPU that
    # would be a make_async_remote_copy ring reduce (collective_id + barrier
    # semaphore, P6/P11) overlapped with the next forward's compute, not
    # locally simulated peer copies.
    peers = jnp.stack(
        [slab + 0.01 * (r + 1) for r in range(num_workers - 1)], axis=0
    )
    return pallas_allreduce_mean(slab, peers, tr=tr)


@jax.jit
def _sgd_slab_update(slab, grad_slab, lr):
    return slab - lr * grad_slab


# ---------------------------------------------------------------------------
# LocalSGD wrapper (Python-side state machine, Pallas for the hot paths)
# ---------------------------------------------------------------------------
class LocalSGDPallas:
    """Mirror of torchft.local_sgd.LocalSGD around a Pallas Linear model.

    The canonical parameter state is a single persistent (R, C) f32 slab; the
    sync path (allreduce-mean) runs directly on it with no repacking.
    """

    def __init__(self, params, sync_every, num_simulated_workers=4):
        assert sync_every >= 1, "sync_every must be greater than or equal to 1"
        assert num_simulated_workers >= 2
        self._names = sorted(params.keys())
        self._shapes = [tuple(params[n].shape) for n in self._names]
        self._sizes = [int(math.prod(s)) for s in self._shapes]
        total = sum(self._sizes)
        self._C = _LANES
        self._R, self._tr = _pack_geometry(total)
        # Canonical storage: ONE lane-dense f32 slab, packed once at init.
        self._slab = self._pack(tuple(jnp.asarray(params[n]) for n in self._names))
        # backup copy of the weights (jax arrays are immutable -> hold refs)
        self._backup_slab = self._slab
        self._leaf_cache = None
        self._sync_every = sync_every
        self._local_step = 0
        self._started_step = False
        self._num_workers = num_simulated_workers
        # TODO(synk): real torchft Manager quorum / should_commit / fault
        # handling has no Pallas equivalent; simulated here.

    # -- slab <-> leaves -------------------------------------------------
    def _pack(self, leaves):
        flat = jnp.concatenate([l.reshape(-1).astype(jnp.float32) for l in leaves])
        flat = jnp.pad(flat, (0, self._R * self._C - flat.shape[0]))
        return flat.reshape(self._R, self._C)

    def _leaves(self):
        if self._leaf_cache is None:
            flat = self._slab.reshape(-1)
            out, off = {}, 0
            for n, shp, sz in zip(self._names, self._shapes, self._sizes):
                out[n] = flat[off:off + sz].reshape(shp)
                off += sz
            self._leaf_cache = out
        return self._leaf_cache

    def param(self, name):
        return self._leaves()[name]

    # -- Manager stand-ins -------------------------------------------------
    def _start_quorum(self):
        pass  # simulated quorum start

    def _should_commit(self):
        return True  # simulated healthy quorum

    # -- parameter backup ----------------------------------------------------
    def _save_parameters(self):
        self._backup_slab = self._slab

    def _restore_parameters(self):
        self._slab = self._backup_slab
        self._leaf_cache = None

    # -- forward (delegates to inner model, Pallas matmul kernel) -------------
    def forward(self, x):
        if self._local_step == 0:
            self._start_quorum()
        self._started_step = True
        w = self.param("weight")            # (Fin, Fout)
        b = self.param("bias")              # (Fout,)
        return pallas_linear(x, w, b.reshape(1, -1))

    # -- demo optimizer: SGD applied directly to the slab ----------------------
    def apply_gradients(self, grads, lr):
        gslab = self._pack(tuple(grads[n] for n in self._names))
        self._slab = _sgd_slab_update(self._slab, gslab, lr)
        self._leaf_cache = None

    # -- optimizer post-step hook ---------------------------------------------
    def step_post_hook(self):
        assert self._started_step, "forward must be called before step"
        self._started_step = False
        self._local_step += 1
        if self._local_step >= self._sync_every:
            self._local_step = 0
            self._average()
            if self._should_commit():
                self._save_parameters()
            else:
                self._restore_parameters()

    # -- allreduce-average of all parameters (one fused Pallas kernel) --------
    def _average(self):
        self._slab = _simulate_and_average(
            self._slab, num_workers=self._num_workers, tr=self._tr
        )
        self._leaf_cache = None


# ---------------------------------------------------------------------------
# Demo
# ---------------------------------------------------------------------------
if __name__ == "__main__":
    key = jax.random.PRNGKey(0)
    kx, kw, kb, kg = jax.random.split(key, 4)

    # lane-dense feature dims (multiples of 128), sublane-aligned batch
    B, Fin, Fout = 8, 128, 128
    x = jax.random.normal(kx, (B, Fin), dtype=jnp.float32)
    w = jax.random.normal(kw, (Fin, Fout), dtype=jnp.float32) * 0.05
    b = jax.random.normal(kb, (Fout,), dtype=jnp.float32) * 0.05

    local_sgd = LocalSGDPallas({"weight": w, "bias": b}, sync_every=2)

    lr = 0.1
    out = None
    for step in range(4):  # two full sync cycles (sync_every=2)
        out = local_sgd.forward(x)
        # fake optimizer step (deterministic per-step "gradient")
        kstep = jax.random.fold_in(kg, step)
        gw = 0.001 * jax.random.normal(kstep, (Fin, Fout), dtype=jnp.float32)
        gb = 0.001 * jnp.ones((Fout,), dtype=jnp.float32)
        local_sgd.apply_gradients({"weight": gw, "bias": gb}, lr)
        local_sgd.step_post_hook()

    out = jax.block_until_ready(out)
    jax.block_until_ready(local_sgd._slab)

    # sanity 1: Pallas linear vs pure-JAX reference at the current weights
    #   (bf16 MXU inputs -> compare with a bf16-rounding-sized tolerance)
    w_cur = local_sgd.param("weight")
    b_cur = local_sgd.param("bias")
    ref_fwd = x @ w_cur + b_cur
    got_fwd = pallas_linear(x, w_cur, b_cur.reshape(1, -1))
    assert jnp.allclose(ref_fwd, jax.block_until_ready(got_fwd), atol=3e-2, rtol=3e-2)

    # sanity 2: Pallas allreduce-mean vs pure-JAX mean at a realistic slab size
    #   (exercises the 1 MiB-tile / 2-row-block configuration)
    slab_t = jax.random.normal(kg, (1024, _LANES), dtype=jnp.float32)
    peers_t = jnp.stack([slab_t + 0.01 * (r + 1) for r in range(3)], axis=0)
    expect = (slab_t + peers_t.sum(axis=0)) / 4.0
    Rt, trt = _pack_geometry(1024 * _LANES)
    assert Rt == 1024 and trt == 512
    got_avg = pallas_allreduce_mean(slab_t, peers_t, tr=trt)
    assert jnp.allclose(expect, jax.block_until_ready(got_avg), atol=1e-5, rtol=1e-5)

    assert jnp.all(jnp.isfinite(out))

    print("KERNEL_OK")
</pallas_src>

<mosaic_0001>
module attributes {stable_mosaic.version = 11 : i64} {
  func.func @_linear_kernel(%arg0: i32, %arg1: i32, %arg2: i32, %arg3: memref<8x128xbf16, #tpu.memory_space<vmem>>, %arg4: memref<128x128xbf16, #tpu.memory_space<vmem>>, %arg5: memref<1x128xf32, #tpu.memory_space<vmem>>, %arg6: memref<8x128xf32, #tpu.memory_space<vmem>>, %arg7: memref<8x128xf32, #tpu.memory_space<vmem>>) attributes {dimension_semantics = [#tpu.dimension_semantics<parallel>, #tpu.dimension_semantics<parallel>, #tpu.dimension_semantics<arbitrary>], iteration_bounds = array<i64: 1, 1, 1>, scalar_prefetch = 0 : i64, scratch_operands = 1 : i64, tpu.core_type = #tpu.core_type<tc>, window_params = [{transform_indices = @transform_0, window_bounds = array<i64: 8, 128>}, {transform_indices = @transform_1, window_bounds = array<i64: 128, 128>}, {transform_indices = @transform_2, window_bounds = array<i64: 1, 128>}, {transform_indices = @transform_3, window_bounds = array<i64: 8, 128>}]} {
    %c0_i32 = arith.constant 0 : i32
    %0 = arith.cmpi eq, %arg2, %c0_i32 : i32
    %1 = arith.extui %0 : i1 to i32
    %c0_i32_0 = arith.constant 0 : i32
    %2 = arith.cmpi ne, %1, %c0_i32_0 : i32
    scf.if %2 {
      %cst_10 = arith.constant 0.000000e+00 : f32
      %12 = vector.broadcast %cst_10 : f32 to vector<8x128xf32>
      %c0_11 = arith.constant 0 : index
      %c0_12 = arith.constant 0 : index
      %13 = vector.load %arg7[%c0_11, %c0_12] : memref<8x128xf32, #tpu.memory_space<vmem>>, vector<8x128xf32>
      tpu.vector_store %arg7[%c0_11, %c0_12], %12 {strides = array<i32>} : memref<8x128xf32, #tpu.memory_space<vmem>>, vector<8x128xf32>,
    } else {
    }
    %c0 = arith.constant 0 : index
    %c0_1 = arith.constant 0 : index
    %3 = vector.load %arg7[%c0, %c0_1] : memref<8x128xf32, #tpu.memory_space<vmem>>, vector<8x128xf32>
    %c0_2 = arith.constant 0 : index
    %c0_3 = arith.constant 0 : index
    %4 = vector.load %arg3[%c0_2, %c0_3] : memref<8x128xbf16, #tpu.memory_space<vmem>>, vector<8x128xbf16>
    %c0_4 = arith.constant 0 : index
    %c0_5 = arith.constant 0 : index
    %5 = vector.load %arg4[%c0_4, %c0_5] : memref<128x128xbf16, #tpu.memory_space<vmem>>, vector<128x128xbf16>
    %cst = arith.constant dense<0.000000e+00> : vector<8x128xf32>
    %6 = tpu.matmul %4, %5, %cst {dimension_numbers = #tpu.dot_dimension_numbers<[1], [0], [0], [1], [0, 0, 1, 1], [], []>} : vector<8x128xbf16>, vector<128x128xbf16>, vector<8x128xf32> -> vector<8x128xf32>
    %7 = arith.addf %3, %6 : vector<8x128xf32>
    %c0_6 = arith.constant 0 : index
    %c0_7 = arith.constant 0 : index
    %8 = vector.load %arg7[%c0_6, %c0_7] : memref<8x128xf32, #tpu.memory_space<vmem>>, vector<8x128xf32>
    tpu.vector_store %arg7[%c0_6, %c0_7], %7 {strides = array<i32>} : memref<8x128xf32, #tpu.memory_space<vmem>>, vector<8x128xf32>,
    %c0_i32_8 = arith.constant 0 : i32
    %9 = arith.cmpi eq, %arg2, %c0_i32_8 : i32
    %10 = arith.extui %9 : i1 to i32
    %c0_i32_9 = arith.constant 0 : i32
    %11 = arith.cmpi ne, %10, %c0_i32_9 : i32
    scf.if %11 {
      %c0_10 = arith.constant 0 : index
      %c0_11 = arith.constant 0 : index
      %12 = vector.load %arg7[%c0_10, %c0_11] : memref<8x128xf32, #tpu.memory_space<vmem>>, vector<8x128xf32>
      %c0_12 = arith.constant 0 : index
      %c0_13 = arith.constant 0 : index
      %13 = vector.load %arg5[%c0_12, %c0_13] : memref<1x128xf32, #tpu.memory_space<vmem>>, vector<1x128xf32>
      %14 = vector.broadcast %13 : vector<1x128xf32> to vector<8x128xf32>
      %15 = arith.addf %12, %14 : vector<8x128xf32>
      %c0_14 = arith.constant 0 : index
      %c0_15 = arith.constant 0 : index
      %16 = vector.load %arg6[%c0_14, %c0_15] : memref<8x128xf32, #tpu.memory_space<vmem>>, vector<8x128xf32>
      tpu.vector_store %arg6[%c0_14, %c0_15], %15 {strides = array<i32>} : memref<8x128xf32, #tpu.memory_space<vmem>>, vector<8x128xf32>,
    } else {
    }
    return
  }
  func.func @transform_0(%arg0: i32, %arg1: i32, %arg2: i32) -> (i32, i32) {
    %c0_i32 = arith.constant 0 : i32
    return %arg0, %arg2 : i32, i32
  }
  func.func @transform_1(%arg0: i32, %arg1: i32, %arg2: i32) -> (i32, i32) {
    %c0_i32 = arith.constant 0 : i32
    return %arg2, %arg1 : i32, i32
  }
  func.func @transform_2(%arg0: i32, %arg1: i32, %arg2: i32) -> (i32, i32) {
    %c0_i32 = arith.constant 0 : i32
    %c0_i32_0 = arith.constant 0 : i32
    return %c0_i32, %arg1 : i32, i32
  }
  func.func @transform_3(%arg0: i32, %arg1: i32, %arg2: i32) -> (i32, i32) {
    %c0_i32 = arith.constant 0 : i32
    return %arg0, %arg1 : i32, i32
  }
}

</mosaic_0001>

<llo_original>
// kernel: pallas_linear.1
$region0: #{pallas_linear.1}
  #allocation0 [shape = 'u32[]', space=smem, size = 0x4, offset = 0x4, fixed_abs, tag = 'smem constant byte address 0x4 - core index']
  #allocation1 [shape = 'u32[144,128]{1,0:T(1,128)}', space=vmem, size = 0x12000, scoped, tag = 'internal scratch']
  #allocation2 [shape = 'f32[8,128]{1,0:T(8,128)}', space=vmem, size = 0x1000, scoped, tag = 'scratch operand']
  %s0 = inlined_call_operand.vmem [shape: bf16[8,128], index: 0, kind: input, shape index: {}]
  %s1 = inlined_call_operand.vmem [shape: bf16[128,128], index: 1, kind: input, shape index: {}]
  %s2 = inlined_call_operand.vmem [shape: f32[1,128], index: 2, kind: input, shape index: {}]
  %s3 = inlined_call_operand.hbm [shape: f32[8,128], index: 3, kind: output, shape index: {}]
  %s4 = sld [smem:[#allocation0]]
  $region30: #{pallas_linear.1} parent=0
    _
  %s6 = ssub.s32 1, %s4
  %s7 = scalar_select 0, %s6, %s4
  $region1: #{pallas_linear.1} parent=0
    #allocation3 [shape = 'u8[4096]{0}', space=vmem, size = 0x1000, scoped, tag = 'output window, operand 0, single buffered']
    #allocation4 [shape = 's32[1]{0}', space=sflag, size = 0x4, scoped, tag = 'scoped memory for pallas_linear.1']
    %8 = vsyncpa [#allocation4], 0
    // Predicated region
    $region2: #{pallas_linear.1} parent=1 // pred_check
      _
    $region3: #{pallas_linear.1} parent=1 // pred_check_branch
      %10 = sbr.rel (0) target = $region5
    $region4: #{pallas_linear.1} parent=1 // pred_region
      _
    $region5: #{pallas_linear.1} parent=1 // pred_fallthru
      _
    // Predicated region
    $region6: #{pallas_linear.1} parent=1 // pred_check
      _
    $region7: #{pallas_linear.1} parent=1 // pred_check_branch
      %12 = sbr.rel (0) target = $region9
    $region8: #{pallas_linear.1} parent=1 // pred_region
      _
    $region9: #{pallas_linear.1} parent=1 // pred_fallthru
      _
    // Predicated region
    $region10: #{pallas_linear.1} parent=1 // pred_check
      _
    $region11: #{pallas_linear.1} parent=1 // pred_check_branch
      %14 = sbr.rel (0) target = $region13
    $region12: #{pallas_linear.1} parent=1 // pred_region
      _
    $region13: #{pallas_linear.1} parent=1 // pred_fallthru
      _
    %p16 = scmp.eq.s32.totalorder 0, 0
    // Predicated region
    $region14: #{pallas_linear.1} parent=1 // pred_check
      %p17 = pneg %p16
    $region15: #{pallas_linear.1} parent=1 // pred_check_branch
      %19 = sbr.rel (%p17) target = $region17
    $region16: #{pallas_linear.1} parent=1 // pred_region
      %20 = vst [vmem:[#allocation2] sm:$0xff] 0.0
    $region17: #{pallas_linear.1} parent=1 // pred_fallthru
      _
    %v21 = vld [vmem:[#allocation2] sm:$0xff]
    %v22 = vld [vmem:[%s0] sm:$0xf]
    %v23 = vld [vmem:[%s1] sm:$0xf]
    %v24 = vld [vmem:[%s1 + $0x4] sm:$0xf]
    %v25 = vld [vmem:[%s1 + $0x8] sm:$0xf]
    %v26 = vld [vmem:[%s1 + $0xc] sm:$0xf]
    %v27 = vld [vmem:[%s1 + $0x10] sm:$0xf]
    %v28 = vld [vmem:[%s1 + $0x14] sm:$0xf]
    %v29 = vld [vmem:[%s1 + $0x18] sm:$0xf]
    %v30 = vld [vmem:[%s1 + $0x1c] sm:$0xf]
    %v31 = vld [vmem:[%s1 + $0x20] sm:$0xf]
    %v32 = vld [vmem:[%s1 + $0x24] sm:$0xf]
    %v33 = vld [vmem:[%s1 + $0x28] sm:$0xf]
    %v34 = vld [vmem:[%s1 + $0x2c] sm:$0xf]
    %v35 = vld [vmem:[%s1 + $0x30] sm:$0xf]
    %v36 = vld [vmem:[%s1 + $0x34] sm:$0xf]
    %v37 = vld [vmem:[%s1 + $0x38] sm:$0xf]
    %v38 = vld [vmem:[%s1 + $0x3c] sm:$0xf]
    %v55 = vunpack.c.l.b16 %v23
    %v56 = vunpack.c.l.b16 %v24
    %v57 = vunpack.c.l.b16 %v25
    %v58 = vunpack.c.l.b16 %v26
    %v59 = vunpack.c.l.b16 %v27
    %v60 = vunpack.c.l.b16 %v28
    %v61 = vunpack.c.l.b16 %v29
    %v62 = vunpack.c.l.b16 %v30
    %v63 = vunpack.c.l.b16 %v31
    %v64 = vunpack.c.l.b16 %v32
    %v65 = vunpack.c.l.b16 %v33
    %v66 = vunpack.c.l.b16 %v34
    %v67 = vunpack.c.l.b16 %v35
    %v68 = vunpack.c.l.b16 %v36
    %v69 = vunpack.c.l.b16 %v37
    %v70 = vunpack.c.l.b16 %v38
    %v71 = vpack.c.b16 %v56, %v55
    %v72 = vpack.c.b16 %v58, %v57
    %v73 = vpack.c.b16 %v60, %v59
    %v74 = vpack.c.b16 %v62, %v61
    %v75 = vpack.c.b16 %v64, %v63
    %v76 = vpack.c.b16 %v66, %v65
    %v77 = vpack.c.b16 %v68, %v67
    %v78 = vpack.c.b16 %v70, %v69
    %87 = vmatprep.subr.bf16.mxu0 0
    %88 = vmatpush1.bf16.msra.mxu0 %v71
    %89 = vmatprep.subr.bf16.mxu0 0
    %90 = vmatpush1.bf16.msra.mxu0 %v72
    %91 = vmatprep.subr.bf16.mxu0 0
    %92 = vmatpush1.bf16.msra.mxu0 %v73
    %93 = vmatprep.subr.bf16.mxu0 0
    %94 = vmatpush1.bf16.msra.mxu0 %v74
    %95 = vmatprep.subr.bf16.mxu0 0
    %96 = vmatpush1.bf16.msra.mxu0 %v75
    %97 = vmatprep.subr.bf16.mxu0 0
    %98 = vmatpush1.bf16.msra.mxu0 %v76
    %99 = vmatprep.subr.bf16.mxu0 0
    %100 = vmatpush1.bf16.msra.mxu0 %v77
    %101 = vmatprep.subr.bf16.mxu0 0
    %102 = vmatpush1.bf16.msra.mxu0 %v78
    %103 = vmatprep.subr.bf16.mxu0 0
    %104 = vmatpush1.bf16.msra.mxu0 0
    %105 = vmatprep.subr.bf16.mxu0 0
    %106 = vmatpush1.bf16.msra.mxu0 0
    %107 = vmatprep.subr.bf16.mxu0 0
    %108 = vmatpush1.bf16.msra.mxu0 0
    %109 = vmatprep.subr.bf16.mxu0 0
    %110 = vmatpush1.bf16.msra.mxu0 0
    %111 = vmatprep.subr.bf16.mxu0 0
    %112 = vmatpush1.bf16.msra.mxu0 0
    %113 = vmatprep.subr.bf16.mxu0 0
    %114 = vmatpush1.bf16.msra.mxu0 0
    %115 = vmatprep.subr.bf16.mxu0 0
    %116 = vmatpush1.bf16.msra.mxu0 0
    %117 = vmatprep.subr.bf16.mxu0 0
    %118 = vmatpush1.bf16.msra.mxu0 0
    %119 = vmatprep.mubr.bf16.mxu0 0
    %120 = vmatmul.mubr.bf16.gmra.mrb[0].mxu0 %v22
    %v121 = vpop.f32.mrb[0].mxu0
    %v122 = vadd.f32 0.0, %v121
    %v123 = vpop.f32.mrb[0].mxu0
    %v124 = vpop.f32.mrb[0].mxu0
    %v125 = vpop.f32.mrb[0].mxu0
    %126 = vdwg.mxu0
    %v127 = vadd.f32 %v21, %v122
    %128 = vst [vmem:[#allocation2] sm:$0xff] %v127
    // Predicated region
    $region18: #{pallas_linear.1} parent=1 // pred_check
      %p129 = pneg %p16
    $region19: #{pallas_linear.1} parent=1 // pred_check_branch
      %131 = sbr.rel (%p129) target = $region21
    $region20: #{pallas_linear.1} parent=1 // pred_region
      %v132 = vld [vmem:[#allocation2] sm:$0xff]
      %v133 = vld [vmem:[%s2] sm:$0x1]
      %v135 = vlaneseq
      %v136 = vshrl.u32 %v135, 7
      %v137 = vsub.s32 0, %v136
      %v138 = vrot.slane %v133, %v137
      %v140 = vadd.f32 %v132, %v138
      %141 = vst [vmem:[#allocation3] sm:$0xff] %v140
    $region21: #{pallas_linear.1} parent=1 // pred_fallthru
      _
    // Predicated region
    $region22: #{pallas_linear.1} parent=1 // pred_check
      _
    $region23: #{pallas_linear.1} parent=1 // pred_check_branch
      %143 = sbr.rel (0) target = $region25
    $region24: #{pallas_linear.1} parent=1 // pred_region
      %s145 = ssub.s32 128, 128
      %146 = vsyncadd [#allocation4], %s145
      %s148 = sshll.u32 [#allocation3], 4
      %s149 = int_to_ptr.vmem [resolvable:$true] %s148
      %151 = dma.vmem_to_hbm [thread:$0]  %s149, 128, %s3, [#allocation4]
    $region25: #{pallas_linear.1} parent=1 // pred_fallthru
      _
    // Predicated region
    $region26: #{pallas_linear.1} parent=1 // pred_check
      _
    $region27: #{pallas_linear.1} parent=1 // pred_check_branch
      %153 = sbr.rel (0) target = $region29
    $region28: #{pallas_linear.1} parent=1 // pred_region
      %154 = dma.done [#allocation4], 128
    $region29: #{pallas_linear.1} parent=1 // pred_fallthru
      _
    %155 = vsyncpa [#allocation4], 1

</llo_original>
